<compile_context>
chip_gen: v7x
topology: tpu7x:2x2x1
jax: 0.10.0
libtpu: 0.0.40
codegen_flags: <defaults>
</compile_context>

<pallas_src>
import jax
import jax.numpy as jnp
from jax.experimental import pallas as pl
from jax.experimental.pallas import tpu as pltpu

IMG_FEATS = 28 * 28          # 784  (one flattened image)
IN_FEATS = 2 * IMG_FEATS     # 1568, fixed by nn.Linear(2*28*28, 128)
HIDDEN = 128
NEG_SLOPE = 0.01             # torch.nn.LeakyReLU default
MAX_TILE_B = 1024            # f32 acts: 2 inputs x 2 bufs x 1024x784x4 ~= 12.8 MiB
VMEM_LIMIT_BYTES = 32 * 1024 * 1024   # explicit: v5e default scoped VMEM is 16 MiB


def _round_up(x, m):
    return ((x + m - 1) // m) * m


def _discriminator_kernel(xf_ref, yf_ref, w1x_ref, w1y_ref, b1_ref, w2_ref,
                          b2_ref, out_ref):
    # Cast activations to bf16 on the VPU (free under the DMA bound); the
    # kernel reads f32 straight from HBM so no extra convert pass exists.
    xb = xf_ref[...].astype(jnp.bfloat16)
    yb = yf_ref[...].astype(jnp.bfloat16)

    # fc1 over the (virtual) concat: (TB,784)@(784,128) + (TB,784)@(784,128)
    # bf16 operands, f32 accumulation on the MXU.
    h = jnp.dot(xb, w1x_ref[...], preferred_element_type=jnp.float32)
    h = h + jnp.dot(yb, w1y_ref[...], preferred_element_type=jnp.float32)
    h = h + b1_ref[...]                                   # (TB, 128) f32

    # LeakyReLU (negative_slope = 0.01)
    h = jnp.where(h > 0, h, NEG_SLOPE * h)

    # fc2: (TB,128) . (128,) as a lane reduction (N=1 matmul would waste MXU)
    o = jnp.sum(h * w2_ref[...], axis=-1, keepdims=True) + b2_ref[0]

    # Sigmoid (exact reciprocal; exp already dominates the EUP cost).
    out_ref[...] = pl.reciprocal(1.0 + jnp.exp(-o), approx=False)


def prepare_params(params):
    """One-time layout/dtype prep of fc1/fc2 params for the kernel.

    Call once per parameter update (e.g. per optimizer step), NOT per forward:
    it pre-splits w1 into its x/y halves and pre-casts them to bf16 so the
    forward path does zero per-call weight conversion work.
    """
    w1, b1, w2, b2 = params
    w1x = jnp.asarray(w1[:IMG_FEATS, :], jnp.bfloat16)     # (784, 128)
    w1y = jnp.asarray(w1[IMG_FEATS:, :], jnp.bfloat16)     # (784, 128)
    b1_r = jnp.asarray(b1, jnp.float32).reshape(1, HIDDEN)  # (1, 128)
    w2_r = jnp.asarray(w2, jnp.float32).reshape(1, HIDDEN)  # (1, 128)
    b2_r = jnp.asarray(b2, jnp.float32).reshape(1)           # (1,) -> SMEM
    return w1x, w1y, b1_r, w2_r, b2_r


def discriminator_forward(x, y, kernel_params):
    """x, y: (B, 1, 28, 28) float32 (NCHW). Returns (B,) float32."""
    w1x, w1y, b1_r, w2_r, b2_r = kernel_params
    B = x.shape[0]

    # Tile the batch:
    #  - at least 2 grid steps so ("parallel",) shards across both v7x TCs,
    #  - capped at MAX_TILE_B to bound double-buffered VMEM on all gens.
    half = _round_up(pl.cdiv(B, 2), 8)
    tile_b = max(8, min(MAX_TILE_B, half))
    n_tiles = pl.cdiv(B, tile_b)

    # Cheap layout glue only — no dtype conversion, no (B,1568) concat.
    flat_x = x.reshape(B, IMG_FEATS)
    flat_y = y.reshape(B, IMG_FEATS)

    out = pl.pallas_call(
        _discriminator_kernel,
        out_shape=jax.ShapeDtypeStruct((B, 1), jnp.float32),
        grid=(n_tiles,),
        in_specs=[
            pl.BlockSpec((tile_b, IMG_FEATS), lambda i: (i, 0)),   # x tile (f32)
            pl.BlockSpec((tile_b, IMG_FEATS), lambda i: (i, 0)),   # y tile (f32)
            pl.BlockSpec((IMG_FEATS, HIDDEN), lambda i: (0, 0)),   # w1 top (resident)
            pl.BlockSpec((IMG_FEATS, HIDDEN), lambda i: (0, 0)),   # w1 bot (resident)
            pl.BlockSpec((1, HIDDEN), lambda i: (0, 0)),           # b1     (resident)
            pl.BlockSpec((1, HIDDEN), lambda i: (0, 0)),           # w2     (resident)
            pl.BlockSpec(memory_space=pltpu.MemorySpace.SMEM),     # b2 scalar
        ],
        out_specs=pl.BlockSpec((tile_b, 1), lambda i: (i, 0)),
        compiler_params=pltpu.CompilerParams(
            dimension_semantics=("parallel",),
            vmem_limit_bytes=VMEM_LIMIT_BYTES),
    )(flat_x, flat_y, w1x, w1y, b1_r, w2_r, b2_r)

    # out.view(-1, 1).squeeze(1)
    return out.reshape(-1)


def init_params(key):
    """Deterministic init matching torch.nn.Linear default (U(-1/sqrt(fan_in), +))."""
    k1, k2, k3, k4 = jax.random.split(key, 4)
    bound1 = 1.0 / jnp.sqrt(IN_FEATS)
    w1 = jax.random.uniform(k1, (IN_FEATS, HIDDEN), jnp.float32, -bound1, bound1)
    b1 = jax.random.uniform(k2, (1, HIDDEN), jnp.float32, -bound1, bound1)
    bound2 = 1.0 / jnp.sqrt(HIDDEN)
    w2 = jax.random.uniform(k3, (HIDDEN, 1), jnp.float32, -bound2, bound2)
    b2 = jax.random.uniform(k4, (1, 1), jnp.float32, -bound2, bound2)
    return w1, b1, w2, b2


if __name__ == "__main__":
    key = jax.random.PRNGKey(0)
    kx, ky, kp = jax.random.split(key, 3)

    B = 2
    x = jax.random.normal(kx, (B, 1, 28, 28), jnp.float32)
    y = jax.random.normal(ky, (B, 1, 28, 28), jnp.float32)
    params = init_params(kp)
    kernel_params = prepare_params(params)   # once per param update

    out = discriminator_forward(x, y, kernel_params)
    jax.block_until_ready(out)

    # Pure-JAX f32 reference (kernel uses bf16 fc1 operands, so tolerance is
    # loosened slightly vs exact f32).
    flat = jnp.concatenate((x.reshape(B, -1), y.reshape(B, -1)), axis=1)
    h = flat @ params[0] + params[1]
    h = jnp.where(h > 0, h, NEG_SLOPE * h)
    ref = jax.nn.sigmoid(h @ params[2] + params[3]).reshape(-1)

    assert out.shape == (B,)
    assert bool(jnp.all(jnp.isfinite(out)))
    assert jnp.allclose(out, ref, atol=2e-2, rtol=2e-2), (out, ref)

    print("KERNEL_OK")
</pallas_src>

<mosaic_0001>
module attributes {stable_mosaic.version = 11 : i64} {
  func.func @_discriminator_kernel(%arg0: i32, %arg1: memref<8x784xf32, #tpu.memory_space<vmem>>, %arg2: memref<8x784xf32, #tpu.memory_space<vmem>>, %arg3: memref<784x128xbf16, #tpu.memory_space<vmem>>, %arg4: memref<784x128xbf16, #tpu.memory_space<vmem>>, %arg5: memref<1x128xf32, #tpu.memory_space<vmem>>, %arg6: memref<1x128xf32, #tpu.memory_space<vmem>>, %arg7: memref<1xf32, #tpu.memory_space<smem>>, %arg8: memref<8x1xf32, #tpu.memory_space<vmem>>) attributes {dimension_semantics = [#tpu.dimension_semantics<parallel>], iteration_bounds = array<i64: 1>, scalar_prefetch = 0 : i64, scratch_operands = 0 : i64, tpu.core_type = #tpu.core_type<tc>, window_params = [{transform_indices = @transform_0, window_bounds = array<i64: 8, 784>}, {transform_indices = @transform_1, window_bounds = array<i64: 8, 784>}, {pipeline_mode = #tpu.pipeline_mode<synchronous>, transform_indices = @transform_2, window_bounds = array<i64: 784, 128>}, {pipeline_mode = #tpu.pipeline_mode<synchronous>, transform_indices = @transform_3, window_bounds = array<i64: 784, 128>}, {pipeline_mode = #tpu.pipeline_mode<synchronous>, transform_indices = @transform_4, window_bounds = array<i64: 1, 128>}, {pipeline_mode = #tpu.pipeline_mode<synchronous>, transform_indices = @transform_5, window_bounds = array<i64: 1, 128>}, {transform_indices = @transform_6, window_bounds = array<i64: 1>}, {transform_indices = @transform_7, window_bounds = array<i64: 8, 1>}]} {
    %c0 = arith.constant 0 : index
    %c0_0 = arith.constant 0 : index
    %0 = vector.load %arg1[%c0, %c0_0] : memref<8x784xf32, #tpu.memory_space<vmem>>, vector<8x784xf32>
    %1 = arith.truncf %0 : vector<8x784xf32> to vector<8x784xbf16>
    %c0_1 = arith.constant 0 : index
    %c0_2 = arith.constant 0 : index
    %2 = vector.load %arg2[%c0_1, %c0_2] : memref<8x784xf32, #tpu.memory_space<vmem>>, vector<8x784xf32>
    %3 = arith.truncf %2 : vector<8x784xf32> to vector<8x784xbf16>
    %c0_3 = arith.constant 0 : index
    %c0_4 = arith.constant 0 : index
    %4 = vector.load %arg3[%c0_3, %c0_4] : memref<784x128xbf16, #tpu.memory_space<vmem>>, vector<784x128xbf16>
    %cst = arith.constant dense<0.000000e+00> : vector<8x128xf32>
    %5 = tpu.matmul %1, %4, %cst {dimension_numbers = #tpu.dot_dimension_numbers<[1], [0], [0], [1], [0, 0, 1, 1], [], []>} : vector<8x784xbf16>, vector<784x128xbf16>, vector<8x128xf32> -> vector<8x128xf32>
    %c0_5 = arith.constant 0 : index
    %c0_6 = arith.constant 0 : index
    %6 = vector.load %arg4[%c0_5, %c0_6] : memref<784x128xbf16, #tpu.memory_space<vmem>>, vector<784x128xbf16>
    %cst_7 = arith.constant dense<0.000000e+00> : vector<8x128xf32>
    %7 = tpu.matmul %3, %6, %cst_7 {dimension_numbers = #tpu.dot_dimension_numbers<[1], [0], [0], [1], [0, 0, 1, 1], [], []>} : vector<8x784xbf16>, vector<784x128xbf16>, vector<8x128xf32> -> vector<8x128xf32>
    %8 = arith.addf %5, %7 : vector<8x128xf32>
    %c0_8 = arith.constant 0 : index
    %c0_9 = arith.constant 0 : index
    %9 = vector.load %arg5[%c0_8, %c0_9] : memref<1x128xf32, #tpu.memory_space<vmem>>, vector<1x128xf32>
    %10 = vector.broadcast %9 : vector<1x128xf32> to vector<8x128xf32>
    %11 = arith.addf %8, %10 : vector<8x128xf32>
    %cst_10 = arith.constant 0.000000e+00 : f32
    %12 = vector.broadcast %cst_10 : f32 to vector<8x128xf32>
    %13 = arith.cmpf ogt, %11, %12 : vector<8x128xf32>
    %cst_11 = arith.constant 0.00999999977 : f32
    %14 = vector.broadcast %cst_11 : f32 to vector<8x128xf32>
    %15 = arith.mulf %14, %11 : vector<8x128xf32>
    %16 = arith.select %13, %11, %15 : vector<8x128xi1>, vector<8x128xf32>
    %c0_12 = arith.constant 0 : index
    %c0_13 = arith.constant 0 : index
    %17 = vector.load %arg6[%c0_12, %c0_13] : memref<1x128xf32, #tpu.memory_space<vmem>>, vector<1x128xf32>
    %18 = vector.broadcast %17 : vector<1x128xf32> to vector<8x128xf32>
    %19 = arith.mulf %16, %18 : vector<8x128xf32>
    %cst_14 = arith.constant dense<0.000000e+00> : vector<8xf32>
    %20 = vector.multi_reduction <add>, %19, %cst_14 [1] : vector<8x128xf32> to vector<8xf32>
    %21 = vector.shape_cast %20 : vector<8xf32> to vector<8x1xf32>
    %c0_15 = arith.constant 0 : index
    %22 = memref.load %arg7[%c0_15] : memref<1xf32, #tpu.memory_space<smem>>
    %23 = vector.broadcast %22 : f32 to vector<8x1xf32>
    %24 = arith.addf %21, %23 : vector<8x1xf32>
    %cst_16 = arith.constant 0.000000e+00 : f32
    %25 = vector.broadcast %cst_16 : f32 to vector<8x1xf32>
    %26 = arith.subf %25, %24 : vector<8x1xf32>
    %27 = math.exp %26 : vector<8x1xf32>
    %cst_17 = arith.constant 1.000000e+00 : f32
    %28 = vector.broadcast %cst_17 : f32 to vector<8x1xf32>
    %29 = arith.addf %28, %27 : vector<8x1xf32>
    %30 = tpu.reciprocal %29 : vector<8x1xf32> -> vector<8x1xf32>
    %c0_18 = arith.constant 0 : index
    %c0_19 = arith.constant 0 : index
    %31 = vector.load %arg8[%c0_18, %c0_19] : memref<8x1xf32, #tpu.memory_space<vmem>>, vector<8x1xf32>
    tpu.vector_store %arg8[%c0_18, %c0_19], %30 {strides = array<i32>} : memref<8x1xf32, #tpu.memory_space<vmem>>, vector<8x1xf32>,
    return
  }
  func.func @transform_0(%arg0: i32) -> (i32, i32) {
    %c0_i32 = arith.constant 0 : i32
    %c0_i32_0 = arith.constant 0 : i32
    return %arg0, %c0_i32 : i32, i32
  }
  func.func @transform_1(%arg0: i32) -> (i32, i32) {
    %c0_i32 = arith.constant 0 : i32
    %c0_i32_0 = arith.constant 0 : i32
    return %arg0, %c0_i32 : i32, i32
  }
  func.func @transform_2(%arg0: i32) -> (i32, i32) {
    %c0_i32 = arith.constant 0 : i32
    %c0_i32_0 = arith.constant 0 : i32
    %c0_i32_1 = arith.constant 0 : i32
    return %c0_i32, %c0_i32_0 : i32, i32
  }
  func.func @transform_3(%arg0: i32) -> (i32, i32) {
    %c0_i32 = arith.constant 0 : i32
    %c0_i32_0 = arith.constant 0 : i32
    %c0_i32_1 = arith.constant 0 : i32
    return %c0_i32, %c0_i32_0 : i32, i32
  }
  func.func @transform_4(%arg0: i32) -> (i32, i32) {
    %c0_i32 = arith.constant 0 : i32
    %c0_i32_0 = arith.constant 0 : i32
    %c0_i32_1 = arith.constant 0 : i32
    return %c0_i32, %c0_i32_0 : i32, i32
  }
  func.func @transform_5(%arg0: i32) -> (i32, i32) {
    %c0_i32 = arith.constant 0 : i32
    %c0_i32_0 = arith.constant 0 : i32
    %c0_i32_1 = arith.constant 0 : i32
    return %c0_i32, %c0_i32_0 : i32, i32
  }
  func.func @transform_6(%arg0: i32) -> i32 {
    %c0_i32 = arith.constant 0 : i32
    %c0_i32_0 = arith.constant 0 : i32
    return %c0_i32 : i32
  }
  func.func @transform_7(%arg0: i32) -> (i32, i32) {
    %c0_i32 = arith.constant 0 : i32
    %c0_i32_0 = arith.constant 0 : i32
    return %arg0, %c0_i32 : i32, i32
  }
}

</mosaic_0001>

<llo_original>
// kernel: tpu_custom_call.1
$region0: #{tpu_custom_call.1}
  #allocation0 [shape = 'u32[]', space=smem, size = 0x4, offset = 0x4, fixed_abs, tag = 'smem constant byte address 0x4 - core index']
  #allocation1 [shape = 'u32[144,128]{1,0:T(1,128)}', space=vmem, size = 0x12000, scoped, tag = 'internal scratch']
  #allocation2 [shape = 'f32[1]{0:T(128)S(6)}', space=smem, size = 0x200, scoped, tag = 'scoped memory for tpu_custom_call.1']
  %s0 = inlined_call_operand.hbm [shape: f32[2,784], index: 0, kind: input, shape index: {}]
  %s1 = inlined_call_operand.hbm [shape: f32[2,784], index: 1, kind: input, shape index: {}]
  %s2 = inlined_call_operand.hbm [shape: bf16[784,128], index: 2, kind: input, shape index: {}]
  %s3 = inlined_call_operand.hbm [shape: bf16[784,128], index: 3, kind: input, shape index: {}]
  %s4 = inlined_call_operand.vmem [shape: f32[1,128], index: 4, kind: input, shape index: {}]
  %s5 = inlined_call_operand.vmem [shape: f32[1,128], index: 5, kind: input, shape index: {}]
  %s6 = inlined_call_operand.<no memory space> [shape: f32[1], index: 6, kind: input, shape index: {}]
  %s7 = inlined_call_operand.vmem [shape: f32[2,1], index: 7, kind: output, shape index: {}]
  %s8 = sld [smem:[#allocation0]]
  $region84: #{tpu_custom_call.1} parent=0
    _
  %s10 = ssub.s32 1, %s8
  %s11 = scalar_select 0, %s10, %s8
  %12 = sst [smem:[#allocation2]] %s6
  $region1: #{tpu_custom_call.1} parent=0
    #allocation3 [shape = 'u8[28672]{0}', space=vmem, size = 0x7000, scoped, tag = 'input window, operand 0, single buffered']
    #allocation4 [shape = 's32[1]{0}', space=sflag, size = 0x4, scoped, tag = 'scoped memory for tpu_custom_call.1']
    #allocation5 [shape = 'u8[28672]{0}', space=vmem, size = 0x7000, scoped, tag = 'input window, operand 1, single buffered']
    #allocation6 [shape = 's32[1]{0}', space=sflag, size = 0x4, scoped, tag = 'scoped memory for tpu_custom_call.1']
    #allocation7 [shape = 'u8[200704]{0}', space=vmem, size = 0x31000, scoped, tag = 'input window, operand 2, single buffered']
    #allocation8 [shape = 'u8[200704]{0}', space=vmem, size = 0x31000, scoped, tag = 'input window, operand 3, single buffered']
    #allocation9 [shape = 's32[1]{0}', space=sflag, size = 0x4, scoped, tag = 'scoped memory for tpu_custom_call.1']
    #allocation10 [shape = 'u8[4096]{0}', space=vmem, size = 0x1000, scoped, tag = 'output window, operand 0, single buffered']
    %13 = vsyncpa [#allocation4], 0
    %14 = vsyncpa [#allocation6], 0
    %15 = vsyncpa [#allocation9], 0
    // Predicated region
    $region2: #{tpu_custom_call.1} parent=1 // pred_check
      _
    $region3: #{tpu_custom_call.1} parent=1 // pred_check_branch
      %17 = sbr.rel (0) target = $region5
    $region4: #{tpu_custom_call.1} parent=1 // pred_region
      %s19 = ssub.s32 896, 224
      %20 = vsyncadd [#allocation4], %s19
      %s21 = sshll.u32 [#allocation3], 4
      %s22 = int_to_ptr.vmem [resolvable:$true] %s21
      %27 = dma.hbm_to_vmem [thread:$0]  %s0, 224, %s22, [#allocation4], 224, 224, 14
    $region5: #{tpu_custom_call.1} parent=1 // pred_fallthru
      _
    // Predicated region
    $region6: #{tpu_custom_call.1} parent=1 // pred_check
      _
    $region7: #{tpu_custom_call.1} parent=1 // pred_check_branch
      %29 = sbr.rel (0) target = $region9
    $region8: #{tpu_custom_call.1} parent=1 // pred_region
      %s31 = ssub.s32 896, 224
      %32 = vsyncadd [#allocation6], %s31
      %s33 = sshll.u32 [#allocation5], 4
      %s34 = int_to_ptr.vmem [resolvable:$true] %s33
      %39 = dma.hbm_to_vmem [thread:$0]  %s1, 224, %s34, [#allocation6], 224, 224, 14
    $region9: #{tpu_custom_call.1} parent=1 // pred_fallthru
      _
    // Predicated region
    $region10: #{tpu_custom_call.1} parent=1 // pred_check
      _
    $region11: #{tpu_custom_call.1} parent=1 // pred_check_branch
      %41 = sbr.rel (0) target = $region13
    $region12: #{tpu_custom_call.1} parent=1 // pred_region
      %s43 = ssub.s32 6272, 6272
      %44 = vsyncadd [#allocation6], %s43
      %s45 = sshll.u32 [#allocation7], 4
      %s46 = int_to_ptr.vmem [resolvable:$true] %s45
      %51 = dma.hbm_to_vmem [thread:$0]  %s2, 6272, %s46, [#allocation6], 64, 64, 4
    $region13: #{tpu_custom_call.1} parent=1 // pred_fallthru
      _
    // Predicated region
    $region14: #{tpu_custom_call.1} parent=1 // pred_check
      _
    $region15: #{tpu_custom_call.1} parent=1 // pred_check_branch
      %53 = sbr.rel (0) target = $region17
    $region16: #{tpu_custom_call.1} parent=1 // pred_region
      %s55 = ssub.s32 6272, 6272
      %56 = vsyncadd [#allocation9], %s55
      %s57 = sshll.u32 [#allocation8], 4
      %s58 = int_to_ptr.vmem [resolvable:$true] %s57
      %63 = dma.hbm_to_vmem [thread:$0]  %s3, 6272, %s58, [#allocation9], 64, 64, 4
    $region17: #{tpu_custom_call.1} parent=1 // pred_fallthru
      _
    // Predicated region
    $region18: #{tpu_custom_call.1} parent=1 // pred_check
      _
    $region19: #{tpu_custom_call.1} parent=1 // pred_check_branch
      %65 = sbr.rel (0) target = $region21
    $region20: #{tpu_custom_call.1} parent=1 // pred_region
      _
    $region21: #{tpu_custom_call.1} parent=1 // pred_fallthru
      _
    // Predicated region
    $region22: #{tpu_custom_call.1} parent=1 // pred_check
      _
    $region23: #{tpu_custom_call.1} parent=1 // pred_check_branch
      %67 = sbr.rel (0) target = $region25
    $region24: #{tpu_custom_call.1} parent=1 // pred_region
      _
    $region25: #{tpu_custom_call.1} parent=1 // pred_fallthru
      _
    // Predicated region
    $region26: #{tpu_custom_call.1} parent=1 // pred_check
      _
    $region27: #{tpu_custom_call.1} parent=1 // pred_check_branch
      %69 = sbr.rel (0) target = $region29
    $region28: #{tpu_custom_call.1} parent=1 // pred_region
      _
    $region29: #{tpu_custom_call.1} parent=1 // pred_fallthru
      _
    // Predicated region
    $region30: #{tpu_custom_call.1} parent=1 // pred_check
      _
    $region31: #{tpu_custom_call.1} parent=1 // pred_check_branch
      %71 = sbr.rel (0) target = $region33
    $region32: #{tpu_custom_call.1} parent=1 // pred_region
      %72 = dma.done [#allocation4], 896
    $region33: #{tpu_custom_call.1} parent=1 // pred_fallthru
      _
    // Predicated region
    $region34: #{tpu_custom_call.1} parent=1 // pred_check
      _
    $region35: #{tpu_custom_call.1} parent=1 // pred_check_branch
      %74 = sbr.rel (0) target = $region37
    $region36: #{tpu_custom_call.1} parent=1 // pred_region
      %75 = dma.done [#allocation6], 896
    $region37: #{tpu_custom_call.1} parent=1 // pred_fallthru
      _
    // Predicated region
    $region38: #{tpu_custom_call.1} parent=1 // pred_check
      _
    $region39: #{tpu_custom_call.1} parent=1 // pred_check_branch
      %77 = sbr.rel (0) target = $region41
    $region40: #{tpu_custom_call.1} parent=1 // pred_region
      %78 = dma.done [#allocation6], 6272
    $region41: #{tpu_custom_call.1} parent=1 // pred_fallthru
      _
    // Predicated region
    $region42: #{tpu_custom_call.1} parent=1 // pred_check
      _
    $region43: #{tpu_custom_call.1} parent=1 // pred_check_branch
      %80 = sbr.rel (0) target = $region45
    $region44: #{tpu_custom_call.1} parent=1 // pred_region
      %81 = dma.done [#allocation9], 6272
    $region45: #{tpu_custom_call.1} parent=1 // pred_fallthru
      _
    %v83 = vld [vmem:[#allocation3] sm:$0xff]
    %v84 = vld [vmem:[#allocation3 + $0x8] sm:$0x3f]
    %v85 = vld [vmem:[#allocation3 + $0xe] sm:$0xff]
    %v86 = vld [vmem:[#allocation3 + $0x16] sm:$0x3f]
    %v87 = vld [vmem:[#allocation3 + $0x1c] sm:$0xff]
    %v88 = vld [vmem:[#allocation3 + $0x24] sm:$0x3f]
    %v89 = vld [vmem:[#allocation3 + $0x2a] sm:$0xff]
    %v90 = vld [vmem:[#allocation3 + $0x32] sm:$0x3f]
    %v99 = vcombine.low %v83, %v85
    %v100 = vcombine.high %v83, %v85
    %v101 = vcombine.low %v87, %v89
    %v102 = vcombine.high %v87, %v89
    %v104 = vunpack.c.l.s4 1983009808
    %v105 = vunpack.c.0.s8 %v104
    %v106 = vlaneseq
    %v107 = vshrl.u32 %v106, 7
    %v108 = vsub.s32 %v105, %v107
    %v109 = vrot.slane %v99, %v108
    %v111 = vunpack.c.l.s4 1983009808
    %v112 = vunpack.c.0.s8 %v111
    %v113 = vlaneseq
    %v114 = vshrl.u32 %v113, 7
    %v115 = vsub.s32 %v112, %v114
    %v116 = vrot.slane %v100, %v115
    %v118 = vunpack.c.l.s4 1983009808
    %v119 = vunpack.c.0.s8 %v118
    %v120 = vlaneseq
    %v121 = vshrl.u32 %v120, 7
    %v122 = vsub.s32 %v119, %v121
    %v123 = vrot.slane %v101, %v122
    %v125 = vunpack.c.l.s4 1983009808
    %v126 = vunpack.c.0.s8 %v125
    %v127 = vlaneseq
    %v128 = vshrl.u32 %v127, 7
    %v129 = vsub.s32 %v126, %v128
    %v130 = vrot.slane %v102, %v129
    %v131 = vcombine.low %v109, %v123
    %v132 = vcombine.high %v109, %v123
    %v133 = vcombine.low %v116, %v130
    %v134 = vcombine.high %v116, %v130
    %v135 = vcombine.low %v84, %v86
    %v136 = vcombine.high %v84, %v86
    %v137 = vcombine.low %v88, %v90
    %v138 = vcombine.high %v88, %v90
    %v140 = vunpack.c.l.s4 1983009808
    %v141 = vunpack.c.0.s8 %v140
    %v142 = vlaneseq
    %v143 = vshrl.u32 %v142, 7
    %v144 = vsub.s32 %v141, %v143
    %v145 = vrot.slane %v135, %v144
    %v147 = vunpack.c.l.s4 1983009808
    %v148 = vunpack.c.0.s8 %v147
    %v149 = vlaneseq
    %v150 = vshrl.u32 %v149, 7
    %v151 = vsub.s32 %v148, %v150
    %v152 = vrot.slane %v136, %v151
    %v154 = vunpack.c.l.s4 1983009808
    %v155 = vunpack.c.0.s8 %v154
    %v156 = vlaneseq
    %v157 = vshrl.u32 %v156, 7
    %v158 = vsub.s32 %v155, %v157
    %v159 = vrot.slane %v137, %v158
    %v161 = vunpack.c.l.s4 1983009808
    %v162 = vunpack.c.0.s8 %v161
    %v163 = vlaneseq
    %v164 = vshrl.u32 %v163, 7
    %v165 = vsub.s32 %v162, %v164
    %v166 = vrot.slane %v138, %v165
    %v167 = vcombine.low %v145, %v159
    %v168 = vcombine.high %v145, %v159
    %v169 = vcombine.low %v152, %v166
    %v177 = vpack.c.bf16 %v131, %v131
    %v178 = vpack.c.bf16 %v132, %v132
    %v179 = vpack.c.bf16 %v133, %v133
    %v180 = vpack.c.bf16 %v134, %v134
    %v181 = vpack.c.bf16 %v167, %v167
    %v182 = vpack.c.bf16 %v168, %v168
    %v183 = vpack.c.bf16 %v169, %v169
    %v184 = vld [vmem:[#allocation5] sm:$0xff]
    %v185 = vld [vmem:[#allocation5 + $0x8] sm:$0x3f]
    %v186 = vld [vmem:[#allocation5 + $0xe] sm:$0xff]
    %v187 = vld [vmem:[#allocation5 + $0x16] sm:$0x3f]
    %v188 = vld [vmem:[#allocation5 + $0x1c] sm:$0xff]
    %v189 = vld [vmem:[#allocation5 + $0x24] sm:$0x3f]
    %v190 = vld [vmem:[#allocation5 + $0x2a] sm:$0xff]
    %v191 = vld [vmem:[#allocation5 + $0x32] sm:$0x3f]
    %v200 = vcombine.low %v184, %v186
    %v201 = vcombine.high %v184, %v186
    %v202 = vcombine.low %v188, %v190
    %v203 = vcombine.high %v188, %v190
    %v205 = vunpack.c.l.s4 1983009808
    %v206 = vunpack.c.0.s8 %v205
    %v207 = vlaneseq
    %v208 = vshrl.u32 %v207, 7
    %v209 = vsub.s32 %v206, %v208
    %v210 = vrot.slane %v200, %v209
    %v212 = vunpack.c.l.s4 1983009808
    %v213 = vunpack.c.0.s8 %v212
    %v214 = vlaneseq
    %v215 = vshrl.u32 %v214, 7
    %v216 = vsub.s32 %v213, %v215
    %v217 = vrot.slane %v201, %v216
    %v219 = vunpack.c.l.s4 1983009808
    %v220 = vunpack.c.0.s8 %v219
    %v221 = vlaneseq
    %v222 = vshrl.u32 %v221, 7
    %v223 = vsub.s32 %v220, %v222
    %v224 = vrot.slane %v202, %v223
    %v226 = vunpack.c.l.s4 1983009808
    %v227 = vunpack.c.0.s8 %v226
    %v228 = vlaneseq
    %v229 = vshrl.u32 %v228, 7
    %v230 = vsub.s32 %v227, %v229
    %v231 = vrot.slane %v203, %v230
    %v232 = vcombine.low %v210, %v224
    %v233 = vcombine.high %v210, %v224
    %v234 = vcombine.low %v217, %v231
    %v235 = vcombine.high %v217, %v231
    %v236 = vcombine.low %v185, %v187
    %v237 = vcombine.high %v185, %v187
    %v238 = vcombine.low %v189, %v191
    %v239 = vcombine.high %v189, %v191
    %v241 = vunpack.c.l.s4 1983009808
    %v242 = vunpack.c.0.s8 %v241
    %v243 = vlaneseq
    %v244 = vshrl.u32 %v243, 7
    %v245 = vsub.s32 %v242, %v244
    %v246 = vrot.slane %v236, %v245
    %v248 = vunpack.c.l.s4 1983009808
    %v249 = vunpack.c.0.s8 %v248
    %v250 = vlaneseq
    %v251 = vshrl.u32 %v250, 7
    %v252 = vsub.s32 %v249, %v251
    %v253 = vrot.slane %v237, %v252
    %v255 = vunpack.c.l.s4 1983009808
    %v256 = vunpack.c.0.s8 %v255
    %v257 = vlaneseq
    %v258 = vshrl.u32 %v257, 7
    %v259 = vsub.s32 %v256, %v258
    %v260 = vrot.slane %v238, %v259
    %v262 = vunpack.c.l.s4 1983009808
    %v263 = vunpack.c.0.s8 %v262
    %v264 = vlaneseq
    %v265 = vshrl.u32 %v264, 7
    %v266 = vsub.s32 %v263, %v265
    %v267 = vrot.slane %v239, %v266
    %v268 = vcombine.low %v246, %v260
    %v269 = vcombine.high %v246, %v260
    %v270 = vcombine.low %v253, %v267
    %v278 = vpack.c.bf16 %v232, %v232
    %v279 = vpack.c.bf16 %v233, %v233
    %v280 = vpack.c.bf16 %v234, %v234
    %v281 = vpack.c.bf16 %v235, %v235
    %v282 = vpack.c.bf16 %v268, %v268
    %v283 = vpack.c.bf16 %v269, %v269
    %v284 = vpack.c.bf16 %v270, %v270
    %v285 = vld [vmem:[#allocation7] sm:$0xf]
    %v286 = vld [vmem:[#allocation7 + $0x4] sm:$0xf]
    %v287 = vld [vmem:[#allocation7 + $0x8] sm:$0xf]
    %v288 = vld [vmem:[#allocation7 + $0xc] sm:$0xf]
    %v289 = vld [vmem:[#allocation7 + $0x10] sm:$0xf]
    %v290 = vld [vmem:[#allocation7 + $0x14] sm:$0xf]
    %v291 = vld [vmem:[#allocation7 + $0x18] sm:$0xf]
    %v292 = vld [vmem:[#allocation7 + $0x1c] sm:$0xf]
    %v293 = vld [vmem:[#allocation7 + $0x20] sm:$0xf]
    %v294 = vld [vmem:[#allocation7 + $0x24] sm:$0xf]
    %v295 = vld [vmem:[#allocation7 + $0x28] sm:$0xf]
    %v296 = vld [vmem:[#allocation7 + $0x2c] sm:$0xf]
    %v297 = vld [vmem:[#allocation7 + $0x30] sm:$0xf]
    %v298 = vld [vmem:[#allocation7 + $0x34] sm:$0xf]
    %v299 = vld [vmem:[#allocation7 + $0x38] sm:$0xf]
    %v300 = vld [vmem:[#allocation7 + $0x3c] sm:$0xf]
    %v301 = vld [vmem:[#allocation7 + $0x40] sm:$0xf]
    %v302 = vld [vmem:[#allocation7 + $0x44] sm:$0xf]
    %v303 = vld [vmem:[#allocation7 + $0x48] sm:$0xf]
    %v304 = vld [vmem:[#allocation7 + $0x4c] sm:$0xf]
    %v305 = vld [vmem:[#allocation7 + $0x50] sm:$0xf]
    %v306 = vld [vmem:[#allocation7 + $0x54] sm:$0xf]
    %v307 = vld [vmem:[#allocation7 + $0x58] sm:$0xf]
    %v308 = vld [vmem:[#allocation7 + $0x5c] sm:$0xf]
    %v309 = vld [vmem:[#allocation7 + $0x60] sm:$0xf]
    %v310 = vld [vmem:[#allocation7 + $0x64] sm:$0xf]
    %v311 = vld [vmem:[#allocation7 + $0x68] sm:$0xf]
    %v312 = vld [vmem:[#allocation7 + $0x6c] sm:$0xf]
    %v313 = vld [vmem:[#allocation7 + $0x70] sm:$0xf]
    %v314 = vld [vmem:[#allocation7 + $0x74] sm:$0xf]
    %v315 = vld [vmem:[#allocation7 + $0x78] sm:$0xf]
    %v316 = vld [vmem:[#allocation7 + $0x7c] sm:$0xf]
    %v317 = vld [vmem:[#allocation7 + $0x80] sm:$0xf]
    %v318 = vld [vmem:[#allocation7 + $0x84] sm:$0xf]
    %v319 = vld [vmem:[#allocation7 + $0x88] sm:$0xf]
    %v320 = vld [vmem:[#allocation7 + $0x8c] sm:$0xf]
    %v321 = vld [vmem:[#allocation7 + $0x90] sm:$0xf]
    %v322 = vld [vmem:[#allocation7 + $0x94] sm:$0xf]
    %v323 = vld [vmem:[#allocation7 + $0x98] sm:$0xf]
    %v324 = vld [vmem:[#allocation7 + $0x9c] sm:$0xf]
    %v325 = vld [vmem:[#allocation7 + $0xa0] sm:$0xf]
    %v326 = vld [vmem:[#allocation7 + $0xa4] sm:$0xf]
    %v327 = vld [vmem:[#allocation7 + $0xa8] sm:$0xf]
    %v328 = vld [vmem:[#allocation7 + $0xac] sm:$0xf]
    %v329 = vld [vmem:[#allocation7 + $0xb0] sm:$0xf]
    %v330 = vld [vmem:[#allocation7 + $0xb4] sm:$0xf]
    %v331 = vld [vmem:[#allocation7 + $0xb8] sm:$0xf]
    %v332 = vld [vmem:[#allocation7 + $0xbc] sm:$0xf]
    %v333 = vld [vmem:[#allocation7 + $0xc0] sm:$0xf]
    %v334 = vld [vmem:[#allocation7 + $0xc4] sm:$0xf]
    %v335 = vld [vmem:[#allocation7 + $0xc8] sm:$0xf]
    %v336 = vld [vmem:[#allocation7 + $0xcc] sm:$0xf]
    %v337 = vld [vmem:[#allocation7 + $0xd0] sm:$0xf]
    %v338 = vld [vmem:[#allocation7 + $0xd4] sm:$0xf]
    %v339 = vld [vmem:[#allocation7 + $0xd8] sm:$0xf]
    %v340 = vld [vmem:[#allocation7 + $0xdc] sm:$0xf]
    %v341 = vld [vmem:[#allocation7 + $0xe0] sm:$0xf]
    %v342 = vld [vmem:[#allocation7 + $0xe4] sm:$0xf]
    %v343 = vld [vmem:[#allocation7 + $0xe8] sm:$0xf]
    %v344 = vld [vmem:[#allocation7 + $0xec] sm:$0xf]
    %v345 = vld [vmem:[#allocation7 + $0xf0] sm:$0xf]
    %v346 = vld [vmem:[#allocation7 + $0xf4] sm:$0xf]
    %v347 = vld [vmem:[#allocation7 + $0xf8] sm:$0xf]
    %v348 = vld [vmem:[#allocation7 + $0xfc] sm:$0xf]
    %v349 = vld [vmem:[#allocation7 + $0x100] sm:$0xf]
    %v350 = vld [vmem:[#allocation7 + $0x104] sm:$0xf]
    %v351 = vld [vmem:[#allocation7 + $0x108] sm:$0xf]
    %v352 = vld [vmem:[#allocation7 + $0x10c] sm:$0xf]
    %v353 = vld [vmem:[#allocation7 + $0x110] sm:$0xf]
    %v354 = vld [vmem:[#allocation7 + $0x114] sm:$0xf]
    %v355 = vld [vmem:[#allocation7 + $0x118] sm:$0xf]
    %v356 = vld [vmem:[#allocation7 + $0x11c] sm:$0xf]
    %v357 = vld [vmem:[#allocation7 + $0x120] sm:$0xf]
    %v358 = vld [vmem:[#allocation7 + $0x124] sm:$0xf]
    %v359 = vld [vmem:[#allocation7 + $0x128] sm:$0xf]
    %v360 = vld [vmem:[#allocation7 + $0x12c] sm:$0xf]
    %v361 = vld [vmem:[#allocation7 + $0x130] sm:$0xf]
    %v362 = vld [vmem:[#allocation7 + $0x134] sm:$0xf]
    %v363 = vld [vmem:[#allocation7 + $0x138] sm:$0xf]
    %v364 = vld [vmem:[#allocation7 + $0x13c] sm:$0xf]
    %v365 = vld [vmem:[#allocation7 + $0x140] sm:$0xf]
    %v366 = vld [vmem:[#allocation7 + $0x144] sm:$0xf]
    %v367 = vld [vmem:[#allocation7 + $0x148] sm:$0xf]
    %v368 = vld [vmem:[#allocation7 + $0x14c] sm:$0xf]
    %v369 = vld [vmem:[#allocation7 + $0x150] sm:$0xf]
    %v370 = vld [vmem:[#allocation7 + $0x154] sm:$0xf]
    %v371 = vld [vmem:[#allocation7 + $0x158] sm:$0xf]
    %v372 = vld [vmem:[#allocation7 + $0x15c] sm:$0xf]
    %v373 = vld [vmem:[#allocation7 + $0x160] sm:$0xf]
    %v374 = vld [vmem:[#allocation7 + $0x164] sm:$0xf]
    %v375 = vld [vmem:[#allocation7 + $0x168] sm:$0xf]
    %v376 = vld [vmem:[#allocation7 + $0x16c] sm:$0xf]
    %v377 = vld [vmem:[#allocation7 + $0x170] sm:$0xf]
    %v378 = vld [vmem:[#allocation7 + $0x174] sm:$0xf]
    %v379 = vld [vmem:[#allocation7 + $0x178] sm:$0xf]
    %v380 = vld [vmem:[#allocation7 + $0x17c] sm:$0xf]
    %v381 = vld [vmem:[#allocation7 + $0x180] sm:$0xf]
    %v382 = vld [vmem:[#allocation7 + $0x184] sm:$0xf]
    %v383 = vld [vmem:[#allocation8] sm:$0xf]
    %v384 = vld [vmem:[#allocation8 + $0x4] sm:$0xf]
    %v385 = vld [vmem:[#allocation8 + $0x8] sm:$0xf]
    %v386 = vld [vmem:[#allocation8 + $0xc] sm:$0xf]
    %v387 = vld [vmem:[#allocation8 + $0x10] sm:$0xf]
    %v388 = vld [vmem:[#allocation8 + $0x14] sm:$0xf]
    %v389 = vld [vmem:[#allocation8 + $0x18] sm:$0xf]
    %v390 = vld [vmem:[#allocation8 + $0x1c] sm:$0xf]
    %v391 = vld [vmem:[#allocation8 + $0x20] sm:$0xf]
    %v392 = vld [vmem:[#allocation8 + $0x24] sm:$0xf]
    %v393 = vld [vmem:[#allocation8 + $0x28] sm:$0xf]
    %v394 = vld [vmem:[#allocation8 + $0x2c] sm:$0xf]
    %v395 = vld [vmem:[#allocation8 + $0x30] sm:$0xf]
    %v396 = vld [vmem:[#allocation8 + $0x34] sm:$0xf]
    %v397 = vld [vmem:[#allocation8 + $0x38] sm:$0xf]
    %v398 = vld [vmem:[#allocation8 + $0x3c] sm:$0xf]
    %v399 = vld [vmem:[#allocation8 + $0x40] sm:$0xf]
    %v400 = vld [vmem:[#allocation8 + $0x44] sm:$0xf]
    %v401 = vld [vmem:[#allocation8 + $0x48] sm:$0xf]
    %v402 = vld [vmem:[#allocation8 + $0x4c] sm:$0xf]
    %v403 = vld [vmem:[#allocation8 + $0x50] sm:$0xf]
    %v404 = vld [vmem:[#allocation8 + $0x54] sm:$0xf]
    %v405 = vld [vmem:[#allocation8 + $0x58] sm:$0xf]
    %v406 = vld [vmem:[#allocation8 + $0x5c] sm:$0xf]
    %v407 = vld [vmem:[#allocation8 + $0x60] sm:$0xf]
    %v408 = vld [vmem:[#allocation8 + $0x64] sm:$0xf]
    %v409 = vld [vmem:[#allocation8 + $0x68] sm:$0xf]
    %v410 = vld [vmem:[#allocation8 + $0x6c] sm:$0xf]
    %v411 = vld [vmem:[#allocation8 + $0x70] sm:$0xf]
    %v412 = vld [vmem:[#allocation8 + $0x74] sm:$0xf]
    %v413 = vld [vmem:[#allocation8 + $0x78] sm:$0xf]
    %v414 = vld [vmem:[#allocation8 + $0x7c] sm:$0xf]
    %v415 = vld [vmem:[#allocation8 + $0x80] sm:$0xf]
    %v416 = vld [vmem:[#allocation8 + $0x84] sm:$0xf]
    %v417 = vld [vmem:[#allocation8 + $0x88] sm:$0xf]
    %v418 = vld [vmem:[#allocation8 + $0x8c] sm:$0xf]
    %v419 = vld [vmem:[#allocation8 + $0x90] sm:$0xf]
    %v420 = vld [vmem:[#allocation8 + $0x94] sm:$0xf]
    %v421 = vld [vmem:[#allocation8 + $0x98] sm:$0xf]
    %v422 = vld [vmem:[#allocation8 + $0x9c] sm:$0xf]
    %v423 = vld [vmem:[#allocation8 + $0xa0] sm:$0xf]
    %v424 = vld [vmem:[#allocation8 + $0xa4] sm:$0xf]
    %v425 = vld [vmem:[#allocation8 + $0xa8] sm:$0xf]
    %v426 = vld [vmem:[#allocation8 + $0xac] sm:$0xf]
    %v427 = vld [vmem:[#allocation8 + $0xb0] sm:$0xf]
    %v428 = vld [vmem:[#allocation8 + $0xb4] sm:$0xf]
    %v429 = vld [vmem:[#allocation8 + $0xb8] sm:$0xf]
    %v430 = vld [vmem:[#allocation8 + $0xbc] sm:$0xf]
    %v431 = vld [vmem:[#allocation8 + $0xc0] sm:$0xf]
    %v432 = vld [vmem:[#allocation8 + $0xc4] sm:$0xf]
    %v433 = vld [vmem:[#allocation8 + $0xc8] sm:$0xf]
    %v434 = vld [vmem:[#allocation8 + $0xcc] sm:$0xf]
    %v435 = vld [vmem:[#allocation8 + $0xd0] sm:$0xf]
    %v436 = vld [vmem:[#allocation8 + $0xd4] sm:$0xf]
    %v437 = vld [vmem:[#allocation8 + $0xd8] sm:$0xf]
    %v438 = vld [vmem:[#allocation8 + $0xdc] sm:$0xf]
    %v439 = vld [vmem:[#allocation8 + $0xe0] sm:$0xf]
    %v440 = vld [vmem:[#allocation8 + $0xe4] sm:$0xf]
    %v441 = vld [vmem:[#allocation8 + $0xe8] sm:$0xf]
    %v442 = vld [vmem:[#allocation8 + $0xec] sm:$0xf]
    %v443 = vld [vmem:[#allocation8 + $0xf0] sm:$0xf]
    %v444 = vld [vmem:[#allocation8 + $0xf4] sm:$0xf]
    %v445 = vld [vmem:[#allocation8 + $0xf8] sm:$0xf]
    %v446 = vld [vmem:[#allocation8 + $0xfc] sm:$0xf]
    %v447 = vld [vmem:[#allocation8 + $0x100] sm:$0xf]
    %v448 = vld [vmem:[#allocation8 + $0x104] sm:$0xf]
    %v449 = vld [vmem:[#allocation8 + $0x108] sm:$0xf]
    %v450 = vld [vmem:[#allocation8 + $0x10c] sm:$0xf]
    %v451 = vld [vmem:[#allocation8 + $0x110] sm:$0xf]
    %v452 = vld [vmem:[#allocation8 + $0x114] sm:$0xf]
    %v453 = vld [vmem:[#allocation8 + $0x118] sm:$0xf]
    %v454 = vld [vmem:[#allocation8 + $0x11c] sm:$0xf]
    %v455 = vld [vmem:[#allocation8 + $0x120] sm:$0xf]
    %v456 = vld [vmem:[#allocation8 + $0x124] sm:$0xf]
    %v457 = vld [vmem:[#allocation8 + $0x128] sm:$0xf]
    %v458 = vld [vmem:[#allocation8 + $0x12c] sm:$0xf]
    %v459 = vld [vmem:[#allocation8 + $0x130] sm:$0xf]
    %v460 = vld [vmem:[#allocation8 + $0x134] sm:$0xf]
    %v461 = vld [vmem:[#allocation8 + $0x138] sm:$0xf]
    %v462 = vld [vmem:[#allocation8 + $0x13c] sm:$0xf]
    %v463 = vld [vmem:[#allocation8 + $0x140] sm:$0xf]
    %v464 = vld [vmem:[#allocation8 + $0x144] sm:$0xf]
    %v465 = vld [vmem:[#allocation8 + $0x148] sm:$0xf]
    %v466 = vld [vmem:[#allocation8 + $0x14c] sm:$0xf]
    %v467 = vld [vmem:[#allocation8 + $0x150] sm:$0xf]
    %v468 = vld [vmem:[#allocation8 + $0x154] sm:$0xf]
    %v469 = vld [vmem:[#allocation8 + $0x158] sm:$0xf]
    %v470 = vld [vmem:[#allocation8 + $0x15c] sm:$0xf]
    %v471 = vld [vmem:[#allocation8 + $0x160] sm:$0xf]
    %v472 = vld [vmem:[#allocation8 + $0x164] sm:$0xf]
    %v473 = vld [vmem:[#allocation8 + $0x168] sm:$0xf]
    %v474 = vld [vmem:[#allocation8 + $0x16c] sm:$0xf]
    %v475 = vld [vmem:[#allocation8 + $0x170] sm:$0xf]
    %v476 = vld [vmem:[#allocation8 + $0x174] sm:$0xf]
    %v477 = vld [vmem:[#allocation8 + $0x178] sm:$0xf]
    %v478 = vld [vmem:[#allocation8 + $0x17c] sm:$0xf]
    %v479 = vld [vmem:[#allocation8 + $0x180] sm:$0xf]
    %v480 = vld [vmem:[#allocation8 + $0x184] sm:$0xf]
    %v579 = vunpack.c.l.b16 %v383
    %v580 = vunpack.c.l.b16 %v384
    %v581 = vunpack.c.l.b16 %v385
    %v582 = vunpack.c.l.b16 %v386
    %v583 = vunpack.c.l.b16 %v387
    %v584 = vunpack.c.l.b16 %v388
    %v585 = vunpack.c.l.b16 %v389
    %v586 = vunpack.c.l.b16 %v390
    %v587 = vunpack.c.l.b16 %v391
    %v588 = vunpack.c.l.b16 %v392
    %v589 = vunpack.c.l.b16 %v393
    %v590 = vunpack.c.l.b16 %v394
    %v591 = vunpack.c.l.b16 %v395
    %v592 = vunpack.c.l.b16 %v396
    %v593 = vunpack.c.l.b16 %v397
    %v594 = vunpack.c.l.b16 %v398
    %v595 = vunpack.c.l.b16 %v399
    %v596 = vunpack.c.l.b16 %v400
    %v597 = vunpack.c.l.b16 %v401
    %v598 = vunpack.c.l.b16 %v402
    %v599 = vunpack.c.l.b16 %v403
    %v600 = vunpack.c.l.b16 %v404
    %v601 = vunpack.c.l.b16 %v405
    %v602 = vunpack.c.l.b16 %v406
    %v603 = vunpack.c.l.b16 %v407
    %v604 = vunpack.c.l.b16 %v408
    %v605 = vunpack.c.l.b16 %v409
    %v606 = vunpack.c.l.b16 %v410
    %v607 = vunpack.c.l.b16 %v411
    %v608 = vunpack.c.l.b16 %v412
    %v609 = vunpack.c.l.b16 %v413
    %v610 = vunpack.c.l.b16 %v414
    %v611 = vunpack.c.l.b16 %v415
    %v612 = vunpack.c.l.b16 %v416
    %v613 = vunpack.c.l.b16 %v417
    %v614 = vunpack.c.l.b16 %v418
    %v615 = vunpack.c.l.b16 %v419
    %v616 = vunpack.c.l.b16 %v420
    %v617 = vunpack.c.l.b16 %v421
    %v618 = vunpack.c.l.b16 %v422
    %v619 = vunpack.c.l.b16 %v423
    %v620 = vunpack.c.l.b16 %v424
    %v621 = vunpack.c.l.b16 %v425
    %v622 = vunpack.c.l.b16 %v426
    %v623 = vunpack.c.l.b16 %v427
    %v624 = vunpack.c.l.b16 %v428
    %v625 = vunpack.c.l.b16 %v429
    %v626 = vunpack.c.l.b16 %v430
    %v627 = vunpack.c.l.b16 %v431
    %v628 = vunpack.c.l.b16 %v432
    %v629 = vunpack.c.l.b16 %v433
    %v630 = vunpack.c.l.b16 %v434
    %v631 = vunpack.c.l.b16 %v435
    %v632 = vunpack.c.l.b16 %v436
    %v633 = vunpack.c.l.b16 %v437
    %v634 = vunpack.c.l.b16 %v438
    %v635 = vunpack.c.l.b16 %v439
    %v636 = vunpack.c.l.b16 %v440
    %v637 = vunpack.c.l.b16 %v441
    %v638 = vunpack.c.l.b16 %v442
    %v639 = vunpack.c.l.b16 %v443
    %v640 = vunpack.c.l.b16 %v444
    %v641 = vunpack.c.l.b16 %v445
    %v642 = vunpack.c.l.b16 %v446
    %v643 = vunpack.c.l.b16 %v447
    %v644 = vunpack.c.l.b16 %v448
    %v645 = vunpack.c.l.b16 %v449
    %v646 = vunpack.c.l.b16 %v450
    %v647 = vunpack.c.l.b16 %v451
    %v648 = vunpack.c.l.b16 %v452
    %v649 = vunpack.c.l.b16 %v453
    %v650 = vunpack.c.l.b16 %v454
    %v651 = vunpack.c.l.b16 %v455
    %v652 = vunpack.c.l.b16 %v456
    %v653 = vunpack.c.l.b16 %v457
    %v654 = vunpack.c.l.b16 %v458
    %v655 = vunpack.c.l.b16 %v459
    %v656 = vunpack.c.l.b16 %v460
    %v657 = vunpack.c.l.b16 %v461
    %v658 = vunpack.c.l.b16 %v462
    %v659 = vunpack.c.l.b16 %v463
    %v660 = vunpack.c.l.b16 %v464
    %v661 = vunpack.c.l.b16 %v465
    %v662 = vunpack.c.l.b16 %v466
    %v663 = vunpack.c.l.b16 %v467
    %v664 = vunpack.c.l.b16 %v468
    %v665 = vunpack.c.l.b16 %v469
    %v666 = vunpack.c.l.b16 %v470
    %v667 = vunpack.c.l.b16 %v471
    %v668 = vunpack.c.l.b16 %v472
    %v669 = vunpack.c.l.b16 %v473
    %v670 = vunpack.c.l.b16 %v474
    %v671 = vunpack.c.l.b16 %v475
    %v672 = vunpack.c.l.b16 %v476
    %v673 = vunpack.c.l.b16 %v477
    %v674 = vunpack.c.l.b16 %v478
    %v675 = vunpack.c.l.b16 %v479
    %v676 = vunpack.c.l.b16 %v480
    %v677 = vpack.c.b16 %v580, %v579
    %v678 = vpack.c.b16 %v582, %v581
    %v679 = vpack.c.b16 %v584, %v583
    %v680 = vpack.c.b16 %v586, %v585
    %v681 = vpack.c.b16 %v588, %v587
    %v682 = vpack.c.b16 %v590, %v589
    %v683 = vpack.c.b16 %v592, %v591
    %v684 = vpack.c.b16 %v594, %v593
    %v685 = vpack.c.b16 %v596, %v595
    %v686 = vpack.c.b16 %v598, %v597
    %v687 = vpack.c.b16 %v600, %v599
    %v688 = vpack.c.b16 %v602, %v601
    %v689 = vpack.c.b16 %v604, %v603
    %v690 = vpack.c.b16 %v606, %v605
    %v691 = vpack.c.b16 %v608, %v607
    %v692 = vpack.c.b16 %v610, %v609
    %v693 = vpack.c.b16 %v612, %v611
    %v694 = vpack.c.b16 %v614, %v613
    %v695 = vpack.c.b16 %v616, %v615
    %v696 = vpack.c.b16 %v618, %v617
    %v697 = vpack.c.b16 %v620, %v619
    %v698 = vpack.c.b16 %v622, %v621
    %v699 = vpack.c.b16 %v624, %v623
    %v700 = vpack.c.b16 %v626, %v625
    %v701 = vpack.c.b16 %v628, %v627
    %v702 = vpack.c.b16 %v630, %v629
    %v703 = vpack.c.b16 %v632, %v631
    %v704 = vpack.c.b16 %v634, %v633
    %v705 = vpack.c.b16 %v636, %v635
    %v706 = vpack.c.b16 %v638, %v637
    %v707 = vpack.c.b16 %v640, %v639
    %v708 = vpack.c.b16 %v642, %v641
    %v709 = vpack.c.b16 %v644, %v643
    %v710 = vpack.c.b16 %v646, %v645
    %v711 = vpack.c.b16 %v648, %v647
    %v712 = vpack.c.b16 %v650, %v649
    %v713 = vpack.c.b16 %v652, %v651
    %v714 = vpack.c.b16 %v654, %v653
    %v715 = vpack.c.b16 %v656, %v655
    %v716 = vpack.c.b16 %v658, %v657
    %v717 = vpack.c.b16 %v660, %v659
    %v718 = vpack.c.b16 %v662, %v661
    %v719 = vpack.c.b16 %v664, %v663
    %v720 = vpack.c.b16 %v666, %v665
    %v721 = vpack.c.b16 %v668, %v667
    %v722 = vpack.c.b16 %v670, %v669
    %v723 = vpack.c.b16 %v672, %v671
    %v724 = vpack.c.b16 %v674, %v673
    %v725 = vpack.c.b16 %v676, %v675
    %vm775 = vcmask 130048
    %v777 = vsel %vm775, %v284, 0
    %779 = vmatprep.subr.bf16.mxu0 0
    %780 = vmatpush1.bf16.msra.mxu0 %v677
    %781 = vmatprep.subr.bf16.mxu0 0
    %782 = vmatpush1.bf16.msra.mxu0 %v678
    %783 = vmatprep.subr.bf16.mxu0 0
    %784 = vmatpush1.bf16.msra.mxu0 %v679
    %785 = vmatprep.subr.bf16.mxu0 0
    %786 = vmatpush1.bf16.msra.mxu0 %v680
    %787 = vmatprep.subr.bf16.mxu0 0
    %788 = vmatpush1.bf16.msra.mxu0 %v681
    %789 = vmatprep.subr.bf16.mxu0 0
    %790 = vmatpush1.bf16.msra.mxu0 %v682
    %791 = vmatprep.subr.bf16.mxu0 0
    %792 = vmatpush1.bf16.msra.mxu0 %v683
    %793 = vmatprep.subr.bf16.mxu0 0
    %794 = vmatpush1.bf16.msra.mxu0 %v684
    %795 = vmatprep.subr.bf16.mxu0 0
    %796 = vmatpush1.bf16.msra.mxu0 %v685
    %797 = vmatprep.subr.bf16.mxu0 0
    %798 = vmatpush1.bf16.msra.mxu0 %v686
    %799 = vmatprep.subr.bf16.mxu0 0
    %800 = vmatpush1.bf16.msra.mxu0 %v687
    %801 = vmatprep.subr.bf16.mxu0 0
    %802 = vmatpush1.bf16.msra.mxu0 %v688
    %803 = vmatprep.subr.bf16.mxu0 0
    %804 = vmatpush1.bf16.msra.mxu0 %v689
    %805 = vmatprep.subr.bf16.mxu0 0
    %806 = vmatpush1.bf16.msra.mxu0 %v690
    %807 = vmatprep.subr.bf16.mxu0 0
    %808 = vmatpush1.bf16.msra.mxu0 %v691
    %809 = vmatprep.subr.bf16.mxu0 0
    %810 = vmatpush1.bf16.msra.mxu0 %v692
    %811 = vmatprep.mubr.bf16.mxu0 %v279
    %812 = vmatmul.mubr.bf16.gmra.mrb[0].mxu0 %v278
    %v813 = vpop.f32.mrb[0].mxu0
    %v814 = vadd.f32 0.0, %v813
    %v815 = vpop.f32.mrb[0].mxu0
    %v816 = vpop.f32.mrb[0].mxu0
    %v817 = vpop.f32.mrb[0].mxu0
    %818 = vdwg.mxu0
    %819 = vmatprep.subr.bf16.mxu0 0
    %820 = vmatpush1.bf16.msra.mxu0 %v693
    %821 = vmatprep.subr.bf16.mxu0 0
    %822 = vmatpush1.bf16.msra.mxu0 %v694
    %823 = vmatprep.subr.bf16.mxu0 0
    %824 = vmatpush1.bf16.msra.mxu0 %v695
    %825 = vmatprep.subr.bf16.mxu0 0
    %826 = vmatpush1.bf16.msra.mxu0 %v696
    %827 = vmatprep.subr.bf16.mxu0 0
    %828 = vmatpush1.bf16.msra.mxu0 %v697
    %829 = vmatprep.subr.bf16.mxu0 0
    %830 = vmatpush1.bf16.msra.mxu0 %v698
    %831 = vmatprep.subr.bf16.mxu0 0
    %832 = vmatpush1.bf16.msra.mxu0 %v699
    %833 = vmatprep.subr.bf16.mxu0 0
    %834 = vmatpush1.bf16.msra.mxu0 %v700
    %835 = vmatprep.subr.bf16.mxu0 0
    %836 = vmatpush1.bf16.msra.mxu0 %v701
    %837 = vmatprep.subr.bf16.mxu0 0
    %838 = vmatpush1.bf16.msra.mxu0 %v702
    %839 = vmatprep.subr.bf16.mxu0 0
    %840 = vmatpush1.bf16.msra.mxu0 %v703
    %841 = vmatprep.subr.bf16.mxu0 0
    %842 = vmatpush1.bf16.msra.mxu0 %v704
    %843 = vmatprep.subr.bf16.mxu0 0
    %844 = vmatpush1.bf16.msra.mxu0 %v705
    %845 = vmatprep.subr.bf16.mxu0 0
    %846 = vmatpush1.bf16.msra.mxu0 %v706
    %847 = vmatprep.subr.bf16.mxu0 0
    %848 = vmatpush1.bf16.msra.mxu0 %v707
    %849 = vmatprep.subr.bf16.mxu0 0
    %850 = vmatpush1.bf16.msra.mxu0 %v708
    %851 = vmatprep.mubr.bf16.mxu0 %v281
    %852 = vmatmul.mubr.bf16.gmra.mrb[0].mxu0 %v280
    %v853 = vpop.f32.mrb[0].mxu0
    %v854 = vadd.f32 %v814, %v853
    %v855 = vpop.f32.mrb[0].mxu0
    %v856 = vpop.f32.mrb[0].mxu0
    %v857 = vpop.f32.mrb[0].mxu0
    %858 = vdwg.mxu0
    %859 = vmatprep.subr.bf16.mxu0 0
    %860 = vmatpush1.bf16.msra.mxu0 %v709
    %861 = vmatprep.subr.bf16.mxu0 0
    %862 = vmatpush1.bf16.msra.mxu0 %v710
    %863 = vmatprep.subr.bf16.mxu0 0
    %864 = vmatpush1.bf16.msra.mxu0 %v711
    %865 = vmatprep.subr.bf16.mxu0 0
    %866 = vmatpush1.bf16.msra.mxu0 %v712
    %867 = vmatprep.subr.bf16.mxu0 0
    %868 = vmatpush1.bf16.msra.mxu0 %v713
    %869 = vmatprep.subr.bf16.mxu0 0
    %870 = vmatpush1.bf16.msra.mxu0 %v714
    %871 = vmatprep.subr.bf16.mxu0 0
    %872 = vmatpush1.bf16.msra.mxu0 %v715
    %873 = vmatprep.subr.bf16.mxu0 0
    %874 = vmatpush1.bf16.msra.mxu0 %v716
    %875 = vmatprep.subr.bf16.mxu0 0
    %876 = vmatpush1.bf16.msra.mxu0 %v717
    %877 = vmatprep.subr.bf16.mxu0 0
    %878 = vmatpush1.bf16.msra.mxu0 %v718
    %879 = vmatprep.subr.bf16.mxu0 0
    %880 = vmatpush1.bf16.msra.mxu0 %v719
    %881 = vmatprep.subr.bf16.mxu0 0
    %882 = vmatpush1.bf16.msra.mxu0 %v720
    %883 = vmatprep.subr.bf16.mxu0 0
    %884 = vmatpush1.bf16.msra.mxu0 %v721
    %885 = vmatprep.subr.bf16.mxu0 0
    %886 = vmatpush1.bf16.msra.mxu0 %v722
    %887 = vmatprep.subr.bf16.mxu0 0
    %888 = vmatpush1.bf16.msra.mxu0 %v723
    %889 = vmatprep.subr.bf16.mxu0 0
    %890 = vmatpush1.bf16.msra.mxu0 %v724
    %891 = vmatprep.mubr.bf16.mxu0 %v283
    %892 = vmatmul.mubr.bf16.gmra.mrb[0].mxu0 %v282
    %v893 = vpop.f32.mrb[0].mxu0
    %v894 = vadd.f32 %v854, %v893
    %v895 = vpop.f32.mrb[0].mxu0
    %v896 = vpop.f32.mrb[0].mxu0
    %v897 = vpop.f32.mrb[0].mxu0
    %898 = vdwg.mxu0
    %899 = vmatprep.subr.bf16.mxu0 0
    %900 = vmatpush1.bf16.msra.mxu0 %v725
    %901 = vmatprep.subr.bf16.mxu0 0
    %902 = vmatpush1.bf16.msra.mxu0 0
    %903 = vmatprep.subr.bf16.mxu0 0
    %904 = vmatpush1.bf16.msra.mxu0 0
    %905 = vmatprep.subr.bf16.mxu0 0
    %906 = vmatpush1.bf16.msra.mxu0 0
    %907 = vmatprep.subr.bf16.mxu0 0
    %908 = vmatpush1.bf16.msra.mxu0 0
    %909 = vmatprep.subr.bf16.mxu0 0
    %910 = vmatpush1.bf16.msra.mxu0 0
    %911 = vmatprep.subr.bf16.mxu0 0
    %912 = vmatpush1.bf16.msra.mxu0 0
    %913 = vmatprep.subr.bf16.mxu0 0
    %914 = vmatpush1.bf16.msra.mxu0 0
    %915 = vmatprep.subr.bf16.mxu0 0
    %916 = vmatpush1.bf16.msra.mxu0 0
    %917 = vmatprep.subr.bf16.mxu0 0
    %918 = vmatpush1.bf16.msra.mxu0 0
    %919 = vmatprep.subr.bf16.mxu0 0
    %920 = vmatpush1.bf16.msra.mxu0 0
    %921 = vmatprep.subr.bf16.mxu0 0
    %922 = vmatpush1.bf16.msra.mxu0 0
    %923 = vmatprep.subr.bf16.mxu0 0
    %924 = vmatpush1.bf16.msra.mxu0 0
    %925 = vmatprep.subr.bf16.mxu0 0
    %926 = vmatpush1.bf16.msra.mxu0 0
    %927 = vmatprep.subr.bf16.mxu0 0
    %928 = vmatpush1.bf16.msra.mxu0 0
    %929 = vmatprep.subr.bf16.mxu0 0
    %930 = vmatpush1.bf16.msra.mxu0 0
    %931 = vmatprep.mubr.bf16.mxu0 0
    %932 = vmatmul.mubr.bf16.gmra.mrb[0].mxu0 %v777
    %v933 = vpop.f32.mrb[0].mxu0
    %v934 = vadd.f32 %v894, %v933
    %v935 = vpop.f32.mrb[0].mxu0
    %v936 = vpop.f32.mrb[0].mxu0
    %v937 = vpop.f32.mrb[0].mxu0
    %938 = vdwg.mxu0
    %v1037 = vunpack.c.l.b16 %v285
    %v1038 = vunpack.c.l.b16 %v286
    %v1039 = vunpack.c.l.b16 %v287
    %v1040 = vunpack.c.l.b16 %v288
    %v1041 = vunpack.c.l.b16 %v289
    %v1042 = vunpack.c.l.b16 %v290
    %v1043 = vunpack.c.l.b16 %v291
    %v1044 = vunpack.c.l.b16 %v292
    %v1045 = vunpack.c.l.b16 %v293
    %v1046 = vunpack.c.l.b16 %v294
    %v1047 = vunpack.c.l.b16 %v295
    %v1048 = vunpack.c.l.b16 %v296
    %v1049 = vunpack.c.l.b16 %v297
    %v1050 = vunpack.c.l.b16 %v298
    %v1051 = vunpack.c.l.b16 %v299
    %v1052 = vunpack.c.l.b16 %v300
    %v1053 = vunpack.c.l.b16 %v301
    %v1054 = vunpack.c.l.b16 %v302
    %v1055 = vunpack.c.l.b16 %v303
    %v1056 = vunpack.c.l.b16 %v304
    %v1057 = vunpack.c.l.b16 %v305
    %v1058 = vunpack.c.l.b16 %v306
    %v1059 = vunpack.c.l.b16 %v307
    %v1060 = vunpack.c.l.b16 %v308
    %v1061 = vunpack.c.l.b16 %v309
    %v1062 = vunpack.c.l.b16 %v310
    %v1063 = vunpack.c.l.b16 %v311
    %v1064 = vunpack.c.l.b16 %v312
    %v1065 = vunpack.c.l.b16 %v313
    %v1066 = vunpack.c.l.b16 %v314
    %v1067 = vunpack.c.l.b16 %v315
    %v1068 = vunpack.c.l.b16 %v316
    %v1069 = vunpack.c.l.b16 %v317
    %v1070 = vunpack.c.l.b16 %v318
    %v1071 = vunpack.c.l.b16 %v319
    %v1072 = vunpack.c.l.b16 %v320
    %v1073 = vunpack.c.l.b16 %v321
    %v1074 = vunpack.c.l.b16 %v322
    %v1075 = vunpack.c.l.b16 %v323
    %v1076 = vunpack.c.l.b16 %v324
    %v1077 = vunpack.c.l.b16 %v325
    %v1078 = vunpack.c.l.b16 %v326
    %v1079 = vunpack.c.l.b16 %v327
    %v1080 = vunpack.c.l.b16 %v328
    %v1081 = vunpack.c.l.b16 %v329
    %v1082 = vunpack.c.l.b16 %v330
    %v1083 = vunpack.c.l.b16 %v331
    %v1084 = vunpack.c.l.b16 %v332
    %v1085 = vunpack.c.l.b16 %v333
    %v1086 = vunpack.c.l.b16 %v334
    %v1087 = vunpack.c.l.b16 %v335
    %v1088 = vunpack.c.l.b16 %v336
    %v1089 = vunpack.c.l.b16 %v337
    %v1090 = vunpack.c.l.b16 %v338
    %v1091 = vunpack.c.l.b16 %v339
    %v1092 = vunpack.c.l.b16 %v340
    %v1093 = vunpack.c.l.b16 %v341
    %v1094 = vunpack.c.l.b16 %v342
    %v1095 = vunpack.c.l.b16 %v343
    %v1096 = vunpack.c.l.b16 %v344
    %v1097 = vunpack.c.l.b16 %v345
    %v1098 = vunpack.c.l.b16 %v346
    %v1099 = vunpack.c.l.b16 %v347
    %v1100 = vunpack.c.l.b16 %v348
    %v1101 = vunpack.c.l.b16 %v349
    %v1102 = vunpack.c.l.b16 %v350
    %v1103 = vunpack.c.l.b16 %v351
    %v1104 = vunpack.c.l.b16 %v352
    %v1105 = vunpack.c.l.b16 %v353
    %v1106 = vunpack.c.l.b16 %v354
    %v1107 = vunpack.c.l.b16 %v355
    %v1108 = vunpack.c.l.b16 %v356
    %v1109 = vunpack.c.l.b16 %v357
    %v1110 = vunpack.c.l.b16 %v358
    %v1111 = vunpack.c.l.b16 %v359
    %v1112 = vunpack.c.l.b16 %v360
    %v1113 = vunpack.c.l.b16 %v361
    %v1114 = vunpack.c.l.b16 %v362
    %v1115 = vunpack.c.l.b16 %v363
    %v1116 = vunpack.c.l.b16 %v364
    %v1117 = vunpack.c.l.b16 %v365
    %v1118 = vunpack.c.l.b16 %v366
    %v1119 = vunpack.c.l.b16 %v367
    %v1120 = vunpack.c.l.b16 %v368
    %v1121 = vunpack.c.l.b16 %v369
    %v1122 = vunpack.c.l.b16 %v370
    %v1123 = vunpack.c.l.b16 %v371
    %v1124 = vunpack.c.l.b16 %v372
    %v1125 = vunpack.c.l.b16 %v373
    %v1126 = vunpack.c.l.b16 %v374
    %v1127 = vunpack.c.l.b16 %v375
    %v1128 = vunpack.c.l.b16 %v376
    %v1129 = vunpack.c.l.b16 %v377
    %v1130 = vunpack.c.l.b16 %v378
    %v1131 = vunpack.c.l.b16 %v379
    %v1132 = vunpack.c.l.b16 %v380
    %v1133 = vunpack.c.l.b16 %v381
    %v1134 = vunpack.c.l.b16 %v382
    %v1135 = vpack.c.b16 %v1038, %v1037
    %v1136 = vpack.c.b16 %v1040, %v1039
    %v1137 = vpack.c.b16 %v1042, %v1041
    %v1138 = vpack.c.b16 %v1044, %v1043
    %v1139 = vpack.c.b16 %v1046, %v1045
    %v1140 = vpack.c.b16 %v1048, %v1047
    %v1141 = vpack.c.b16 %v1050, %v1049
    %v1142 = vpack.c.b16 %v1052, %v1051
    %v1143 = vpack.c.b16 %v1054, %v1053
    %v1144 = vpack.c.b16 %v1056, %v1055
    %v1145 = vpack.c.b16 %v1058, %v1057
    %v1146 = vpack.c.b16 %v1060, %v1059
    %v1147 = vpack.c.b16 %v1062, %v1061
    %v1148 = vpack.c.b16 %v1064, %v1063
    %v1149 = vpack.c.b16 %v1066, %v1065
    %v1150 = vpack.c.b16 %v1068, %v1067
    %v1151 = vpack.c.b16 %v1070, %v1069
    %v1152 = vpack.c.b16 %v1072, %v1071
    %v1153 = vpack.c.b16 %v1074, %v1073
    %v1154 = vpack.c.b16 %v1076, %v1075
    %v1155 = vpack.c.b16 %v1078, %v1077
    %v1156 = vpack.c.b16 %v1080, %v1079
    %v1157 = vpack.c.b16 %v1082, %v1081
    %v1158 = vpack.c.b16 %v1084, %v1083
    %v1159 = vpack.c.b16 %v1086, %v1085
    %v1160 = vpack.c.b16 %v1088, %v1087
    %v1161 = vpack.c.b16 %v1090, %v1089
    %v1162 = vpack.c.b16 %v1092, %v1091
    %v1163 = vpack.c.b16 %v1094, %v1093
    %v1164 = vpack.c.b16 %v1096, %v1095
    %v1165 = vpack.c.b16 %v1098, %v1097
    %v1166 = vpack.c.b16 %v1100, %v1099
    %v1167 = vpack.c.b16 %v1102, %v1101
    %v1168 = vpack.c.b16 %v1104, %v1103
    %v1169 = vpack.c.b16 %v1106, %v1105
    %v1170 = vpack.c.b16 %v1108, %v1107
    %v1171 = vpack.c.b16 %v1110, %v1109
    %v1172 = vpack.c.b16 %v1112, %v1111
    %v1173 = vpack.c.b16 %v1114, %v1113
    %v1174 = vpack.c.b16 %v1116, %v1115
    %v1175 = vpack.c.b16 %v1118, %v1117
    %v1176 = vpack.c.b16 %v1120, %v1119
    %v1177 = vpack.c.b16 %v1122, %v1121
    %v1178 = vpack.c.b16 %v1124, %v1123
    %v1179 = vpack.c.b16 %v1126, %v1125
    %v1180 = vpack.c.b16 %v1128, %v1127
    %v1181 = vpack.c.b16 %v1130, %v1129
    %v1182 = vpack.c.b16 %v1132, %v1131
    %v1183 = vpack.c.b16 %v1134, %v1133
    %v1234 = vsel %vm775, %v183, 0
    %1236 = vmatprep.subr.bf16.mxu0 0
    %1237 = vmatpush1.bf16.msra.mxu0 %v1135
    %1238 = vmatprep.subr.bf16.mxu0 0
    %1239 = vmatpush1.bf16.msra.mxu0 %v1136
    %1240 = vmatprep.subr.bf16.mxu0 0
    %1241 = vmatpush1.bf16.msra.mxu0 %v1137
    %1242 = vmatprep.subr.bf16.mxu0 0
    %1243 = vmatpush1.bf16.msra.mxu0 %v1138
    %1244 = vmatprep.subr.bf16.mxu0 0
    %1245 = vmatpush1.bf16.msra.mxu0 %v1139
    %1246 = vmatprep.subr.bf16.mxu0 0
    %1247 = vmatpush1.bf16.msra.mxu0 %v1140
    %1248 = vmatprep.subr.bf16.mxu0 0
    %1249 = vmatpush1.bf16.msra.mxu0 %v1141
    %1250 = vmatprep.subr.bf16.mxu0 0
    %1251 = vmatpush1.bf16.msra.mxu0 %v1142
    %1252 = vmatprep.subr.bf16.mxu0 0
    %1253 = vmatpush1.bf16.msra.mxu0 %v1143
    %1254 = vmatprep.subr.bf16.mxu0 0
    %1255 = vmatpush1.bf16.msra.mxu0 %v1144
    %1256 = vmatprep.subr.bf16.mxu0 0
    %1257 = vmatpush1.bf16.msra.mxu0 %v1145
    %1258 = vmatprep.subr.bf16.mxu0 0
    %1259 = vmatpush1.bf16.msra.mxu0 %v1146
    %1260 = vmatprep.subr.bf16.mxu0 0
    %1261 = vmatpush1.bf16.msra.mxu0 %v1147
    %1262 = vmatprep.subr.bf16.mxu0 0
    %1263 = vmatpush1.bf16.msra.mxu0 %v1148
    %1264 = vmatprep.subr.bf16.mxu0 0
    %1265 = vmatpush1.bf16.msra.mxu0 %v1149
    %1266 = vmatprep.subr.bf16.mxu0 0
    %1267 = vmatpush1.bf16.msra.mxu0 %v1150
    %1268 = vmatprep.mubr.bf16.mxu0 %v178
    %1269 = vmatmul.mubr.bf16.gmra.mrb[0].mxu0 %v177
    %v1270 = vpop.f32.mrb[0].mxu0
    %v1271 = vadd.f32 %v934, %v1270
    %v1272 = vpop.f32.mrb[0].mxu0
    %v1273 = vpop.f32.mrb[0].mxu0
    %v1274 = vpop.f32.mrb[0].mxu0
    %1275 = vdwg.mxu0
    %1276 = vmatprep.subr.bf16.mxu0 0
    %1277 = vmatpush1.bf16.msra.mxu0 %v1151
    %1278 = vmatprep.subr.bf16.mxu0 0
    %1279 = vmatpush1.bf16.msra.mxu0 %v1152
    %1280 = vmatprep.subr.bf16.mxu0 0
    %1281 = vmatpush1.bf16.msra.mxu0 %v1153
    %1282 = vmatprep.subr.bf16.mxu0 0
    %1283 = vmatpush1.bf16.msra.mxu0 %v1154
    %1284 = vmatprep.subr.bf16.mxu0 0
    %1285 = vmatpush1.bf16.msra.mxu0 %v1155
    %1286 = vmatprep.subr.bf16.mxu0 0
    %1287 = vmatpush1.bf16.msra.mxu0 %v1156
    %1288 = vmatprep.subr.bf16.mxu0 0
    %1289 = vmatpush1.bf16.msra.mxu0 %v1157
    %1290 = vmatprep.subr.bf16.mxu0 0
    %1291 = vmatpush1.bf16.msra.mxu0 %v1158
    %1292 = vmatprep.subr.bf16.mxu0 0
    %1293 = vmatpush1.bf16.msra.mxu0 %v1159
    %1294 = vmatprep.subr.bf16.mxu0 0
    %1295 = vmatpush1.bf16.msra.mxu0 %v1160
    %1296 = vmatprep.subr.bf16.mxu0 0
    %1297 = vmatpush1.bf16.msra.mxu0 %v1161
    %1298 = vmatprep.subr.bf16.mxu0 0
    %1299 = vmatpush1.bf16.msra.mxu0 %v1162
    %1300 = vmatprep.subr.bf16.mxu0 0
    %1301 = vmatpush1.bf16.msra.mxu0 %v1163
    %1302 = vmatprep.subr.bf16.mxu0 0
    %1303 = vmatpush1.bf16.msra.mxu0 %v1164
    %1304 = vmatprep.subr.bf16.mxu0 0
    %1305 = vmatpush1.bf16.msra.mxu0 %v1165
    %1306 = vmatprep.subr.bf16.mxu0 0
    %1307 = vmatpush1.bf16.msra.mxu0 %v1166
    %1308 = vmatprep.mubr.bf16.mxu0 %v180
    %1309 = vmatmul.mubr.bf16.gmra.mrb[0].mxu0 %v179
    %v1310 = vpop.f32.mrb[0].mxu0
    %v1311 = vadd.f32 %v1271, %v1310
    %v1312 = vpop.f32.mrb[0].mxu0
    %v1313 = vpop.f32.mrb[0].mxu0
    %v1314 = vpop.f32.mrb[0].mxu0
    %1315 = vdwg.mxu0
    %1316 = vmatprep.subr.bf16.mxu0 0
    %1317 = vmatpush1.bf16.msra.mxu0 %v1167
    %1318 = vmatprep.subr.bf16.mxu0 0
    %1319 = vmatpush1.bf16.msra.mxu0 %v1168
    %1320 = vmatprep.subr.bf16.mxu0 0
    %1321 = vmatpush1.bf16.msra.mxu0 %v1169
    %1322 = vmatprep.subr.bf16.mxu0 0
    %1323 = vmatpush1.bf16.msra.mxu0 %v1170
    %1324 = vmatprep.subr.bf16.mxu0 0
    %1325 = vmatpush1.bf16.msra.mxu0 %v1171
    %1326 = vmatprep.subr.bf16.mxu0 0
    %1327 = vmatpush1.bf16.msra.mxu0 %v1172
    %1328 = vmatprep.subr.bf16.mxu0 0
    %1329 = vmatpush1.bf16.msra.mxu0 %v1173
    %1330 = vmatprep.subr.bf16.mxu0 0
    %1331 = vmatpush1.bf16.msra.mxu0 %v1174
    %1332 = vmatprep.subr.bf16.mxu0 0
    %1333 = vmatpush1.bf16.msra.mxu0 %v1175
    %1334 = vmatprep.subr.bf16.mxu0 0
    %1335 = vmatpush1.bf16.msra.mxu0 %v1176
    %1336 = vmatprep.subr.bf16.mxu0 0
    %1337 = vmatpush1.bf16.msra.mxu0 %v1177
    %1338 = vmatprep.subr.bf16.mxu0 0
    %1339 = vmatpush1.bf16.msra.mxu0 %v1178
    %1340 = vmatprep.subr.bf16.mxu0 0
    %1341 = vmatpush1.bf16.msra.mxu0 %v1179
    %1342 = vmatprep.subr.bf16.mxu0 0
    %1343 = vmatpush1.bf16.msra.mxu0 %v1180
    %1344 = vmatprep.subr.bf16.mxu0 0
    %1345 = vmatpush1.bf16.msra.mxu0 %v1181
    %1346 = vmatprep.subr.bf16.mxu0 0
    %1347 = vmatpush1.bf16.msra.mxu0 %v1182
    %1348 = vmatprep.mubr.bf16.mxu0 %v182
    %1349 = vmatmul.mubr.bf16.gmra.mrb[0].mxu0 %v181
    %v1350 = vpop.f32.mrb[0].mxu0
    %v1351 = vadd.f32 %v1311, %v1350
    %v1352 = vpop.f32.mrb[0].mxu0
    %v1353 = vpop.f32.mrb[0].mxu0
    %v1354 = vpop.f32.mrb[0].mxu0
    %1355 = vdwg.mxu0
    %1356 = vmatprep.subr.bf16.mxu0 0
    %1357 = vmatpush1.bf16.msra.mxu0 %v1183
    %1358 = vmatprep.subr.bf16.mxu0 0
    %1359 = vmatpush1.bf16.msra.mxu0 0
    %1360 = vmatprep.subr.bf16.mxu0 0
    %1361 = vmatpush1.bf16.msra.mxu0 0
    %1362 = vmatprep.subr.bf16.mxu0 0
    %1363 = vmatpush1.bf16.msra.mxu0 0
    %1364 = vmatprep.subr.bf16.mxu0 0
    %1365 = vmatpush1.bf16.msra.mxu0 0
    %1366 = vmatprep.subr.bf16.mxu0 0
    %1367 = vmatpush1.bf16.msra.mxu0 0
    %1368 = vmatprep.subr.bf16.mxu0 0
    %1369 = vmatpush1.bf16.msra.mxu0 0
    %1370 = vmatprep.subr.bf16.mxu0 0
    %1371 = vmatpush1.bf16.msra.mxu0 0
    %1372 = vmatprep.subr.bf16.mxu0 0
    %1373 = vmatpush1.bf16.msra.mxu0 0
    %1374 = vmatprep.subr.bf16.mxu0 0
    %1375 = vmatpush1.bf16.msra.mxu0 0
    %1376 = vmatprep.subr.bf16.mxu0 0
    %1377 = vmatpush1.bf16.msra.mxu0 0
    %1378 = vmatprep.subr.bf16.mxu0 0
    %1379 = vmatpush1.bf16.msra.mxu0 0
    %1380 = vmatprep.subr.bf16.mxu0 0
    %1381 = vmatpush1.bf16.msra.mxu0 0
    %1382 = vmatprep.subr.bf16.mxu0 0
    %1383 = vmatpush1.bf16.msra.mxu0 0
    %1384 = vmatprep.subr.bf16.mxu0 0
    %1385 = vmatpush1.bf16.msra.mxu0 0
    %1386 = vmatprep.subr.bf16.mxu0 0
    %1387 = vmatpush1.bf16.msra.mxu0 0
    %1388 = vmatprep.mubr.bf16.mxu0 0
    %1389 = vmatmul.mubr.bf16.gmra.mrb[0].mxu0 %v1234
    %v1390 = vpop.f32.mrb[0].mxu0
    %v1391 = vadd.f32 %v1351, %v1390
    %v1392 = vpop.f32.mrb[0].mxu0
    %v1393 = vpop.f32.mrb[0].mxu0
    %v1394 = vpop.f32.mrb[0].mxu0
    %1395 = vdwg.mxu0
    %v1396 = vld [vmem:[%s4] sm:$0x1]
    %v1398 = vlaneseq
    %v1399 = vshrl.u32 %v1398, 7
    %v1400 = vsub.s32 0, %v1399
    %v1401 = vrot.slane %v1396, %v1400
    %v1403 = vadd.f32 %v1391, %v1401
    %vm1404 = vcmp.gt.f32.partialorder %v1403, 0.0
    %v1405 = vmul.f32 %v1403, 0.01
    %v1406 = vsel %vm1404, %v1403, %v1405
    %v1407 = vld [vmem:[%s5] sm:$0x1]
    %v1409 = vlaneseq
    %v1410 = vshrl.u32 %v1409, 7
    %v1411 = vsub.s32 0, %v1410
    %v1412 = vrot.slane %v1407, %v1411
    %v1414 = vmul.f32 %v1406, %v1412
    %1415 = vadd.xlane.f32.xlu0 %v1414
    %v1416 = vpop.xlane.xlu0 %1415
    %s1417 = sld [smem:[#allocation2]]
    %v1418 = vstv %s1417
    %v1419 = vadd.f32 %v1416, %v1418
    %v1420 = vsub.f32 0.0, %v1419
    %v1421 = vmul.f32 %v1420, 1.442695
    %v1422 = vpow.pop %v1421
    %v1423 = vadd.f32 %v1422, 1.0
    %v1424 = vrcp.pop %v1423
    %vm1425 = vcmask 7168
    %1426 = vst.msk [vmem:[#allocation10] sm:$0xff] %vm1425, %v1424
    // Predicated region
    $region46: #{tpu_custom_call.1} parent=1 // pred_check
      _
    $region47: #{tpu_custom_call.1} parent=1 // pred_check_branch
      %1428 = sbr.rel (0) target = $region49
    $region48: #{tpu_custom_call.1} parent=1 // pred_region
      // Predicated region
      $region50: #{tpu_custom_call.1} parent=48 // pred_check
        _
      $region51: #{tpu_custom_call.1} parent=48 // pred_check_branch
        %1430 = sbr.rel (0) target = $region53
      $region52: #{tpu_custom_call.1} parent=48 // pred_region
        // Predicated region
        $region54: #{tpu_custom_call.1} parent=52 // pred_check
          _
        $region55: #{tpu_custom_call.1} parent=52 // pred_check_branch
          %1432 = sbr.rel target = $region57
        $region56: #{tpu_custom_call.1} parent=52 // pred_region
          // Predicated region
          $region69: #{tpu_custom_call.1} parent=56 // pred_check
            _
          $region70: #{tpu_custom_call.1} parent=56 // pred_check_branch
            %1447 = sbr.rel (0) target = $region72
          $region71: #{tpu_custom_call.1} parent=56 // pred_region
            loop: start=0, step=1, limit=1
            $region73: #{tpu_custom_call.1} parent=71 // loop_pre_header
              _
            $region74: #{tpu_custom_call.1} parent=71 // loop_header
              %s1450 = sphi 0, %s1454
              %p1451 = scmp.ge.s32.totalorder %s1450, 1
              %s1455 = sphi [#allocation10], [#allocation10]
              %s1456 = sphi %s7, %s7
            $region75: #{tpu_custom_call.1} parent=71 // loop_header_branch
              %1453 = sbr.rel (%p1451) target = $region79
            $region76: #{tpu_custom_call.1} parent=71 // loop_body
              %v1457 = vld [vmem:[%s1455] sm:$0x3]
              %1458 = vst [vmem:[%s1456] sm:$0x3] %v1457
            $region77: #{tpu_custom_call.1} parent=71 // loop_footer
              %s1454 = sadd.s32 1, %s1450
            $region78: #{tpu_custom_call.1} parent=71 // loop_footer_branch
              %1449 = sbr.rel target = $region74
            $region79: #{tpu_custom_call.1} parent=71 // loop_exit
              _
          $region72: #{tpu_custom_call.1} parent=56 // pred_fallthru
            _
        $region57: #{tpu_custom_call.1} parent=52 // pred_fallthru
          _
        // Predicated region
        $region58: #{tpu_custom_call.1} parent=52 // pred_check
          _
        $region59: #{tpu_custom_call.1} parent=52 // pred_check_branch
          %1434 = sbr.rel (0) target = $region61
        $region60: #{tpu_custom_call.1} parent=52 // pred_region
          loop: start=0, step=1, limit=1
          $region62: #{tpu_custom_call.1} parent=60 // loop_pre_header
            _
          $region63: #{tpu_custom_call.1} parent=60 // loop_header
            %s1437 = sphi 0, %s1441
            %p1438 = scmp.ge.s32.totalorder %s1437, 1
            %s1442 = sphi [#allocation10], [#allocation10]
            %s1443 = sphi %s7, %s7
          $region64: #{tpu_custom_call.1} parent=60 // loop_header_branch
            %1440 = sbr.rel (%p1438) target = $region68
          $region65: #{tpu_custom_call.1} parent=60 // loop_body
            %v1444 = vld [vmem:[%s1442] sm:$0x3]
            %1445 = vst [vmem:[%s1443] sm:$0x3] %v1444
          $region66: #{tpu_custom_call.1} parent=60 // loop_footer
            %s1441 = sadd.s32 1, %s1437
          $region67: #{tpu_custom_call.1} parent=60 // loop_footer_branch
            %1436 = sbr.rel target = $region63
          $region68: #{tpu_custom_call.1} parent=60 // loop_exit
            _
        $region61: #{tpu_custom_call.1} parent=52 // pred_fallthru
          _
      $region53: #{tpu_custom_call.1} parent=48 // pred_fallthru
        _
      %1459 = vnop
    $region49: #{tpu_custom_call.1} parent=1 // pred_fallthru
      _
    // Predicated region
    $region80: #{tpu_custom_call.1} parent=1 // pred_check
      _
    $region81: #{tpu_custom_call.1} parent=1 // pred_check_branch
      %1461 = sbr.rel (0) target = $region83
    $region82: #{tpu_custom_call.1} parent=1 // pred_region
      _
    $region83: #{tpu_custom_call.1} parent=1 // pred_fallthru
      _
    %1462 = vsyncpa [#allocation4], 1
    %1463 = vsyncpa [#allocation6], 1
    %1464 = vsyncpa [#allocation9], 1

</llo_original>
